<compile_context>
chip_gen: v7x
topology: tpu7x:2x2x1
jax: 0.10.0
libtpu: 0.0.40
codegen_flags: <defaults>
</compile_context>

<pallas_src>
import jax
import jax.numpy as jnp
from jax.experimental import pallas as pl
from jax.experimental.pallas import tpu as pltpu


_VMEM_LIMIT_BYTES = 32 * 1024 * 1024     # scoped VMEM asked of Mosaic (safe on v5e/v6e/v7x)
_VMEM_WORKSET_BUDGET = 12 * 1024 * 1024  # cap for double-buffered x + out tiles (headroom left)
_MAX_TILE_LANES = 8192                   # cap on the spatial tile for huge maps


def _round_down_128(v):
    return max(128, (v // 128) * 128)


def _round_up_128(v):
    return ((v + 127) // 128) * 128


def _choose_tiling(N, C, O, HW, dtype_bytes, budget):
    """Pick (nb, t): nb batch samples folded per grid step, t spatial lanes per tile."""
    # Double-buffered x tile + out tile for one sample at full HW.
    per_sample_full = 2 * (C + O) * HW * dtype_bytes

    if per_sample_full <= budget:
        # Full-HW tile: one contiguous DMA per sample instead of C strided rows.
        t = HW
        nb = 1
        if HW <= 1024:
            # Tiny FPN levels: fold batch samples to amortize per-step overhead.
            max_nb = max(1, budget // per_sample_full)
            for cand in range(min(N, max_nb), 0, -1):
                if N % cand == 0:
                    nb = cand
                    break
    else:
        # Large map / many channels: biggest 128-multiple tile under the budget.
        nb = 1
        t_max = budget // (2 * (C + O) * dtype_bytes)
        t = min(_round_down_128(t_max), _MAX_TILE_LANES, HW)
        t = _round_down_128(t)

    # v7x shards the "parallel" grid axes across 2 TensorCores: ensure >= 2 steps.
    steps = (N // nb) * (-(-HW // t))
    if steps < 2:
        if HW >= 256:
            t = _round_up_128(-(-HW // 2))      # two lane-dense spatial tiles
        elif nb > 1:
            for cand in range(nb - 1, 0, -1):   # un-fold the batch instead
                if N % cand == 0:
                    nb = cand
                    break
        # else: one tiny step total; nothing worth splitting.
    return nb, t


def _make_conv1x1_kernel(nb):
    def kernel(x_ref, w_ref, b_ref, o_ref):
        # x_ref: (nb, C, t), w_ref: (O, C), b_ref: (O, 1), o_ref: (nb, O, t)
        w = w_ref[...]
        b = b_ref[...]
        for i in range(nb):  # static unroll over folded batch samples (no transpose)
            acc = jnp.dot(w, x_ref[i], preferred_element_type=jnp.float32)
            o_ref[i] = (acc + b).astype(o_ref.dtype)
    return kernel


def bbox_head_forward(x_nchw, weight_oc11, bias_o):
    """Equivalent of BboxHead.forward: Conv2d(C_in, O, 1x1)(x), NCHW in/out.

    x_nchw:      [N, C, H, W]
    weight_oc11: [O, C, 1, 1]   (PyTorch Conv2d weight layout)
    bias_o:      [O]
    returns      [N, O, H, W]
    """
    N, C, H, W = x_nchw.shape
    O = weight_oc11.shape[0]
    HW = H * W
    dtype_bytes = jnp.dtype(x_nchw.dtype).itemsize

    # Layout glue only: contiguity-preserving reshapes (no HBM transpose).
    x = x_nchw.reshape(N, C, HW)
    w = weight_oc11.reshape(O, C).astype(x.dtype)
    b = bias_o.reshape(O, 1).astype(jnp.float32)

    nb, t = _choose_tiling(N, C, O, HW, dtype_bytes, _VMEM_WORKSET_BUDGET)
    grid = (N // nb, pl.cdiv(HW, t))

    cost = pl.CostEstimate(
        flops=2 * N * O * C * HW,
        bytes_accessed=dtype_bytes * (N * C * HW + N * O * HW)
        + jnp.dtype(w.dtype).itemsize * O * C
        + 4 * O,
        transcendentals=0,
    )

    out = pl.pallas_call(
        _make_conv1x1_kernel(nb),
        out_shape=jax.ShapeDtypeStruct((N, O, HW), x_nchw.dtype),
        grid_spec=pltpu.PrefetchScalarGridSpec(
            num_scalar_prefetch=0,
            grid=grid,
            in_specs=[
                # x: nb batch samples x full channels x spatial tile
                pl.BlockSpec((nb, C, t), lambda n, j: (n, 0, j)),
                # full weight, resident across all grid steps
                pl.BlockSpec((O, C), lambda n, j: (0, 0)),
                # full bias, resident
                pl.BlockSpec((O, 1), lambda n, j: (0, 0)),
            ],
            out_specs=pl.BlockSpec((nb, O, t), lambda n, j: (n, 0, j)),
        ),
        compiler_params=pltpu.CompilerParams(
            # Both axes independent -> shardable across v7x's 2 TensorCores.
            dimension_semantics=("parallel", "parallel"),
            vmem_limit_bytes=_VMEM_LIMIT_BYTES,
        ),
        cost_estimate=cost,
    )(x, w, b)

    return out.reshape(N, O, H, W)


def _reference(x_nchw, weight_oc11, bias_o):
    w = weight_oc11.reshape(weight_oc11.shape[0], weight_oc11.shape[1])  # [O, C]
    out = jnp.einsum(
        "nchw,oc->nohw", x_nchw.astype(jnp.float32), w.astype(jnp.float32)
    )
    return (out + bias_o.astype(jnp.float32)[None, :, None, None]).astype(x_nchw.dtype)


if __name__ == "__main__":
    # Small shapes consistent with BboxHead(inchannels, num_anchors):
    # inchannels=32 (down from 512), num_anchors=3 -> out channels = 3 * 4 = 12.
    N, C, H, W = 2, 32, 16, 16
    num_anchors = 3
    O = num_anchors * 4

    key = jax.random.PRNGKey(0)
    kx, kw, kb = jax.random.split(key, 3)
    x = jax.random.normal(kx, (N, C, H, W), dtype=jnp.float32)
    weight = jax.random.normal(kw, (O, C, 1, 1), dtype=jnp.float32) * 0.05
    bias = jax.random.normal(kb, (O,), dtype=jnp.float32) * 0.1

    out = bbox_head_forward(x, weight, bias)
    out = jax.block_until_ready(out)

    ref = _reference(x, weight, bias)
    assert out.shape == (N, O, H, W), out.shape
    assert jnp.allclose(out, ref, atol=1e-4, rtol=1e-4), float(
        jnp.max(jnp.abs(out - ref))
    )

    print("KERNEL_OK")
</pallas_src>

<mosaic_0001>
module attributes {stable_mosaic.version = 11 : i64} {
  func.func @kernel(%arg0: i32, %arg1: i32, %arg2: memref<2x32x128xf32, #tpu.memory_space<vmem>>, %arg3: memref<12x32xf32, #tpu.memory_space<vmem>>, %arg4: memref<12x1xf32, #tpu.memory_space<vmem>>, %arg5: memref<2x12x128xf32, #tpu.memory_space<vmem>>) attributes {dimension_semantics = [#tpu.dimension_semantics<parallel>, #tpu.dimension_semantics<parallel>], iteration_bounds = array<i64: 1, 2>, scalar_prefetch = 0 : i64, scratch_operands = 0 : i64, tpu.core_type = #tpu.core_type<tc>, window_params = [{transform_indices = @transform_0, window_bounds = array<i64: 2, 32, 128>}, {pipeline_mode = #tpu.pipeline_mode<synchronous>, transform_indices = @transform_1, window_bounds = array<i64: 12, 32>}, {pipeline_mode = #tpu.pipeline_mode<synchronous>, transform_indices = @transform_2, window_bounds = array<i64: 12, 1>}, {transform_indices = @transform_3, window_bounds = array<i64: 2, 12, 128>}]} {
    %c0 = arith.constant 0 : index
    %c0_0 = arith.constant 0 : index
    %0 = vector.load %arg3[%c0, %c0_0] : memref<12x32xf32, #tpu.memory_space<vmem>>, vector<12x32xf32>
    %c0_1 = arith.constant 0 : index
    %c0_2 = arith.constant 0 : index
    %1 = vector.load %arg4[%c0_1, %c0_2] : memref<12x1xf32, #tpu.memory_space<vmem>>, vector<12x1xf32>
    %c0_3 = arith.constant 0 : index
    %c0_4 = arith.constant 0 : index
    %c0_5 = arith.constant 0 : index
    %2 = vector.load %arg2[%c0_3, %c0_4, %c0_5] : memref<2x32x128xf32, #tpu.memory_space<vmem>>, vector<1x32x128xf32>
    %3 = vector.shape_cast %2 : vector<1x32x128xf32> to vector<32x128xf32>
    %cst = arith.constant dense<0.000000e+00> : vector<12x128xf32>
    %4 = tpu.matmul %0, %3, %cst {dimension_numbers = #tpu.dot_dimension_numbers<[1], [0], [0], [1], [0, 0, 1, 1], [], []>} : vector<12x32xf32>, vector<32x128xf32>, vector<12x128xf32> -> vector<12x128xf32>
    %5 = vector.broadcast %1 : vector<12x1xf32> to vector<12x128xf32>
    %6 = arith.addf %4, %5 : vector<12x128xf32>
    %c0_6 = arith.constant 0 : index
    %c0_7 = arith.constant 0 : index
    %c0_8 = arith.constant 0 : index
    %7 = vector.load %arg5[%c0_6, %c0_7, %c0_8] : memref<2x12x128xf32, #tpu.memory_space<vmem>>, vector<1x12x128xf32>
    %8 = vector.shape_cast %7 : vector<1x12x128xf32> to vector<12x128xf32>
    %9 = vector.shape_cast %6 : vector<12x128xf32> to vector<1x12x128xf32>
    tpu.vector_store %arg5[%c0_6, %c0_7, %c0_8], %9 {strides = array<i32>} : memref<2x12x128xf32, #tpu.memory_space<vmem>>, vector<1x12x128xf32>,
    %c1 = arith.constant 1 : index
    %c0_9 = arith.constant 0 : index
    %c0_10 = arith.constant 0 : index
    %10 = vector.load %arg2[%c1, %c0_9, %c0_10] : memref<2x32x128xf32, #tpu.memory_space<vmem>>, vector<1x32x128xf32>
    %11 = vector.shape_cast %10 : vector<1x32x128xf32> to vector<32x128xf32>
    %cst_11 = arith.constant dense<0.000000e+00> : vector<12x128xf32>
    %12 = tpu.matmul %0, %11, %cst_11 {dimension_numbers = #tpu.dot_dimension_numbers<[1], [0], [0], [1], [0, 0, 1, 1], [], []>} : vector<12x32xf32>, vector<32x128xf32>, vector<12x128xf32> -> vector<12x128xf32>
    %13 = vector.broadcast %1 : vector<12x1xf32> to vector<12x128xf32>
    %14 = arith.addf %12, %13 : vector<12x128xf32>
    %c1_12 = arith.constant 1 : index
    %c0_13 = arith.constant 0 : index
    %c0_14 = arith.constant 0 : index
    %15 = vector.load %arg5[%c1_12, %c0_13, %c0_14] : memref<2x12x128xf32, #tpu.memory_space<vmem>>, vector<1x12x128xf32>
    %16 = vector.shape_cast %15 : vector<1x12x128xf32> to vector<12x128xf32>
    %17 = vector.shape_cast %14 : vector<12x128xf32> to vector<1x12x128xf32>
    tpu.vector_store %arg5[%c1_12, %c0_13, %c0_14], %17 {strides = array<i32>} : memref<2x12x128xf32, #tpu.memory_space<vmem>>, vector<1x12x128xf32>,
    return
  }
  func.func @transform_0(%arg0: i32, %arg1: i32) -> (i32, i32, i32) {
    %c0_i32 = arith.constant 0 : i32
    %c0_i32_0 = arith.constant 0 : i32
    return %arg0, %c0_i32, %arg1 : i32, i32, i32
  }
  func.func @transform_1(%arg0: i32, %arg1: i32) -> (i32, i32) {
    %c0_i32 = arith.constant 0 : i32
    %c0_i32_0 = arith.constant 0 : i32
    %c0_i32_1 = arith.constant 0 : i32
    return %c0_i32, %c0_i32_0 : i32, i32
  }
  func.func @transform_2(%arg0: i32, %arg1: i32) -> (i32, i32) {
    %c0_i32 = arith.constant 0 : i32
    %c0_i32_0 = arith.constant 0 : i32
    %c0_i32_1 = arith.constant 0 : i32
    return %c0_i32, %c0_i32_0 : i32, i32
  }
  func.func @transform_3(%arg0: i32, %arg1: i32) -> (i32, i32, i32) {
    %c0_i32 = arith.constant 0 : i32
    %c0_i32_0 = arith.constant 0 : i32
    return %arg0, %c0_i32, %arg1 : i32, i32, i32
  }
}

</mosaic_0001>

<llo_original>
// kernel: tpu_custom_call.1
$region0: #{tpu_custom_call.1}
  #allocation0 [shape = 'u32[]', space=smem, size = 0x4, offset = 0x4, fixed_abs, tag = 'smem constant byte address 0x4 - core index']
  #allocation1 [shape = 'u32[144,128]{1,0:T(1,128)}', space=vmem, size = 0x12000, scoped, tag = 'internal scratch']
  %s0 = inlined_call_operand.hbm [shape: f32[2,32,256], index: 0, kind: input, shape index: {}]
  %s1 = inlined_call_operand.vmem [shape: f32[12,32], index: 1, kind: input, shape index: {}]
  %s2 = inlined_call_operand.vmem [shape: f32[12,1], index: 2, kind: input, shape index: {}]
  %s3 = inlined_call_operand.vmem [shape: f32[2,12,256], index: 3, kind: output, shape index: {}]
  %s4 = sld [smem:[#allocation0]]
  $region83: #{tpu_custom_call.1} parent=0
    _
  %s6 = ssub.s32 1, %s4
  %s7 = scalar_select 0, %s6, %s4
  $region1: #{tpu_custom_call.1} parent=0
    #allocation2 [shape = 'u8[65536]{0}', space=vmem, size = 0x10000, scoped, tag = 'input window, operand 0']
    #allocation3 [shape = 's32[2]{0}', space=sflag, size = 0x8, scoped, tag = 'scoped memory for tpu_custom_call.1']
    #allocation4 [shape = 'u8[32768]{0}', space=vmem, size = 0x8000, scoped, tag = 'output window, operand 0']
    %8 = vsyncpa [#allocation3], 0
    %s9 = scalar_lea.sflag [#allocation3], 1
    %10 = vsyncpa %s9, 0
    loop: start=0, step=1, limit=4
    $region2: #{tpu_custom_call.1} parent=1 // loop_pre_header
      _
    $region3: #{tpu_custom_call.1} parent=1 // loop_header
      %s12 = sphi 0, %s16
      %p13 = scmp.ge.s32.totalorder %s12, 4
      %s19 = sphi 0, %s31
      %s20 = sphi 0, %s27
      %s21 = sphi 0, %s19
      %s22 = sphi 0, %s20
      %s23 = sphi 0, %s21
      %s24 = sphi 0, %s22
      %s36 = sphi 0, %s38
      %s39 = sphi 0, %s36
      %s40 = sphi 0, %s39
      %s56 = sphi 0, %s40
      %s60 = sphi 0, %s60
      %s62 = sphi 0, %s60
      %s63 = sphi 0, %s62
      %s77 = sphi 0, %s63
      %s81 = sphi 0, %s81
      %s83 = sphi 0, %s81
      %s84 = sphi 0, %s83
      %s98 = sphi 0, %s84
      %s106 = sphi 0, %s108
      %s109 = sphi 0, %s106
      %s110 = sphi 0, %s109
      %s126 = sphi 0, %s110
    $region4: #{tpu_custom_call.1} parent=1 // loop_header_branch
      %15 = sbr.rel (%p13) target = $region8
    $region5: #{tpu_custom_call.1} parent=1 // loop_body
      %s17 = ssub.s32 %s12, 1
      %s18 = ssub.s32 %s12, 2
      %s25 = sadd.s32 1, %s20
      %p26 = scmp.ge.s32.totalorder %s25, 2
      %s27 = scalar_select %p26, 0, %s25
      %s28 = sadd.s32 1, %s19
      %s29 = scalar_select %p26, %s28, %s19
      %p30 = scmp.ge.s32.totalorder %s29, 1
      %s31 = scalar_select %p30, 0, %s29
      %s32 = ssub.s32 %s19, %s31
      %s33 = ssub.s32 %s20, %s27
      %s34 = sor.u32 %s32, %s33
      %p35 = scmp.eq.s32.totalorder %s34, 0
      %s37 = sadd.s32 %s36, 1
      %s38 = scalar_select %p35, %s36, %s37
      %p41 = pneg %p35
      %p42 = scmp.eq.s32.totalorder %s12, 1
      %p43 = por %p41, %p42
      %p44 = scmp.ne.s32.totalorder %s36, %s39
      %p45 = scmp.eq.s32.totalorder %s12, 0
      %p46 = por %p44, %p45
      %p47 = scmp.ne.s32.totalorder %s36, %s39
      %p48 = scmp.eq.s32.totalorder %s17, 1
      %p49 = por %p47, %p48
      %p50 = scmp.ne.s32.totalorder %s39, %s40
      %p51 = scmp.eq.s32.totalorder %s17, 0
      %p52 = por %p50, %p51
      %p53 = scmp.ne.s32.totalorder %s39, %s40
      %p54 = scmp.eq.s32.totalorder %s18, 1
      %p55 = por %p53, %p54
      %p57 = scmp.ne.s32.totalorder %s40, %s56
      %p58 = scmp.eq.s32.totalorder %s18, 0
      %p59 = por %p57, %p58
      %s61 = sadd.s32 %s60, 1
      %p64 = scmp.eq.s32.totalorder %s12, 1
      %p65 = scmp.ne.s32.totalorder %s60, %s62
      %p66 = scmp.eq.s32.totalorder %s12, 0
      %p67 = por %p65, %p66
      %p68 = scmp.ne.s32.totalorder %s60, %s62
      %p69 = scmp.eq.s32.totalorder %s17, 1
      %p70 = por %p68, %p69
      %p71 = scmp.ne.s32.totalorder %s62, %s63
      %p72 = scmp.eq.s32.totalorder %s17, 0
      %p73 = por %p71, %p72
      %p74 = scmp.ne.s32.totalorder %s62, %s63
      %p75 = scmp.eq.s32.totalorder %s18, 1
      %p76 = por %p74, %p75
      %p78 = scmp.ne.s32.totalorder %s63, %s77
      %p79 = scmp.eq.s32.totalorder %s18, 0
      %p80 = por %p78, %p79
      %s82 = sadd.s32 %s81, 1
      %p85 = scmp.eq.s32.totalorder %s12, 1
      %p86 = scmp.ne.s32.totalorder %s81, %s83
      %p87 = scmp.eq.s32.totalorder %s12, 0
      %p88 = por %p86, %p87
      %p89 = scmp.ne.s32.totalorder %s81, %s83
      %p90 = scmp.eq.s32.totalorder %s17, 1
      %p91 = por %p89, %p90
      %p92 = scmp.ne.s32.totalorder %s83, %s84
      %p93 = scmp.eq.s32.totalorder %s17, 0
      %p94 = por %p92, %p93
      %p95 = scmp.ne.s32.totalorder %s83, %s84
      %p96 = scmp.eq.s32.totalorder %s18, 1
      %p97 = por %p95, %p96
      %p99 = scmp.ne.s32.totalorder %s84, %s98
      %p100 = scmp.eq.s32.totalorder %s18, 0
      %p101 = por %p99, %p100
      %s102 = ssub.s32 %s19, %s31
      %s103 = ssub.s32 %s20, %s27
      %s104 = sor.u32 %s102, %s103
      %p105 = scmp.eq.s32.totalorder %s104, 0
      %s107 = sadd.s32 %s106, 1
      %s108 = scalar_select %p105, %s106, %s107
      %p111 = pneg %p105
      %p112 = scmp.eq.s32.totalorder %s12, 1
      %p113 = por %p111, %p112
      %p114 = scmp.ne.s32.totalorder %s106, %s109
      %p115 = scmp.eq.s32.totalorder %s12, 0
      %p116 = por %p114, %p115
      %p117 = scmp.ne.s32.totalorder %s106, %s109
      %p118 = scmp.eq.s32.totalorder %s17, 1
      %p119 = por %p117, %p118
      %p120 = scmp.ne.s32.totalorder %s109, %s110
      %p121 = scmp.eq.s32.totalorder %s17, 0
      %p122 = por %p120, %p121
      %p123 = scmp.ne.s32.totalorder %s109, %s110
      %p124 = scmp.eq.s32.totalorder %s18, 1
      %p125 = por %p123, %p124
      %p127 = scmp.ne.s32.totalorder %s110, %s126
      %p128 = scmp.eq.s32.totalorder %s18, 0
      %p129 = por %p127, %p128
      %p130 = scmp.le.s32.totalorder 1, %s12
      %p131 = scmp.lt.s32.totalorder %s12, 3
      %p132 = pnand %p130, %p131
      %p133 = pneg %p132
      // Predicated region
      $region9: #{tpu_custom_call.1} parent=5 // pred_check
        _
      $region10: #{tpu_custom_call.1} parent=5 // pred_check_branch
        %135 = sbr.rel (%p132) target = $region12
      $region11: #{tpu_custom_call.1} parent=5 // pred_region
        %s136 = ssub.s32 %s12, 1
        // Predicated region
        $region13: #{tpu_custom_call.1} parent=11 // pred_check
          %p137 = pneg %p73
        $region14: #{tpu_custom_call.1} parent=11 // pred_check_branch
          %139 = sbr.rel (%p137) target = $region16
        $region15: #{tpu_custom_call.1} parent=11 // pred_region
          _
        $region16: #{tpu_custom_call.1} parent=11 // pred_fallthru
          _
        // Predicated region
        $region17: #{tpu_custom_call.1} parent=11 // pred_check
          %p140 = pneg %p94
        $region18: #{tpu_custom_call.1} parent=11 // pred_check_branch
          %142 = sbr.rel (%p140) target = $region20
        $region19: #{tpu_custom_call.1} parent=11 // pred_region
          _
        $region20: #{tpu_custom_call.1} parent=11 // pred_fallthru
          _
      $region12: #{tpu_custom_call.1} parent=5 // pred_fallthru
        _
      %p143 = scmp.lt.s32.totalorder %s12, 2
      // Predicated region
      $region21: #{tpu_custom_call.1} parent=5 // pred_check
        %p144 = pneg %p143
      $region22: #{tpu_custom_call.1} parent=5 // pred_check_branch
        %146 = sbr.rel (%p144) target = $region24
      $region23: #{tpu_custom_call.1} parent=5 // pred_region
        // Predicated region
        $region25: #{tpu_custom_call.1} parent=23 // pred_check
          %p147 = pneg %p46
        $region26: #{tpu_custom_call.1} parent=23 // pred_check_branch
          %149 = sbr.rel (%p147) target = $region28
        $region27: #{tpu_custom_call.1} parent=23 // pred_region
          %s150 = sand.u32 %s36, 1
          %s151 = scalar_lea.sflag [#allocation3], %s150
          %s152 = sand.u32 %s36, 1
          %s153 = smul.addr %s152, 64
          %s154 = scalar_lea.vmem [#allocation2], %s153
          %s155 = smul.u32 2, %s19
          %s157 = ssub.s32 1024, 1024
          %158 = vsyncadd %s151, %s157
          %s159 = smul.addr %s155, 8
          %s160 = sadd.s32 %s20, %s159
          %s161 = smul.addr %s160, 128
          %s162 = scalar_lea.hbm %s0, %s161
          %s163 = sshll.u32 %s154, 4
          %s164 = int_to_ptr.vmem [resolvable:$true] %s163
          %169 = dma.hbm_to_vmem [thread:$0]  %s162, 1024, %s164, %s151, 256, 128, 8
        $region28: #{tpu_custom_call.1} parent=23 // pred_fallthru
          _
      $region24: #{tpu_custom_call.1} parent=5 // pred_fallthru
        _
      %p170 = scmp.le.s32.totalorder 1, %s12
      %p171 = scmp.lt.s32.totalorder %s12, 3
      %p172 = pnand %p170, %p171
      %p173 = pneg %p172
      // Predicated region
      $region29: #{tpu_custom_call.1} parent=5 // pred_check
        _
      $region30: #{tpu_custom_call.1} parent=5 // pred_check_branch
        %175 = sbr.rel (%p172) target = $region32
      $region31: #{tpu_custom_call.1} parent=5 // pred_region
        %s176 = ssub.s32 %s12, 1
        %s177 = sand.u32 %s39, 1
        %s178 = scalar_lea.sflag [#allocation3], %s177
        %s179 = sand.u32 %s39, 1
        %s180 = smul.addr %s179, 64
        %s181 = scalar_lea.vmem [#allocation2], %s180
        // Predicated region
        $region33: #{tpu_custom_call.1} parent=31 // pred_check
          %p182 = pneg %p52
        $region34: #{tpu_custom_call.1} parent=31 // pred_check_branch
          %184 = sbr.rel (%p182) target = $region36
        $region35: #{tpu_custom_call.1} parent=31 // pred_region
          %185 = dma.done %s178, 1024
        $region36: #{tpu_custom_call.1} parent=31 // pred_fallthru
          _
        %s186 = sand.u32 %s39, 1
        %s187 = scalar_lea.sflag [#allocation3], %s186
        %s188 = sand.u32 %s39, 1
        %s189 = smul.addr %s188, 64
        %s190 = scalar_lea.vmem [#allocation2], %s189
        %p191 = pneg %p52
        %p192 = pneg %p49
        %p193 = pneg %p73
        %p194 = pneg %p70
        %p195 = pneg %p94
        %p196 = pneg %p91
        %p197 = pneg %p122
        %p198 = pneg %p119
        %s199 = sand.u32 %s109, 1
        %s200 = sand.u32 %s109, 1
        %s201 = smul.addr %s200, 32
        %s202 = scalar_lea.vmem [#allocation4], %s201
        %s203 = smul.u32 2, %s21
        %s204 = smul.u32 2, %s21
        %v205 = vld [vmem:[%s1] sm:$0xff]
        %v206 = vld [vmem:[%s1 + $0x8] sm:$0xf]
        %v207 = vld [vmem:[%s2] sm:$0xff]
        %v208 = vld [vmem:[%s2 + $0x8] sm:$0xf]
        %v209 = vld [vmem:[%s181] sm:$0xff]
        %v210 = vld [vmem:[%s181 + $0x8] sm:$0xff]
        %v211 = vld [vmem:[%s181 + $0x10] sm:$0xff]
        %v212 = vld [vmem:[%s181 + $0x18] sm:$0xff]
        %214 = vset.pattern.permute.xlu0 0
        %215 = vperm.xlu0 %214, %v207
        %v216 = vpop.permute.xlu0 %215
        %219 = vset.pattern.permute.xlu0 0
        %220 = vperm.xlu0 %219, %v208
        %v221 = vpop.permute.xlu0 %220
        %vm223 = vcmask 261120
        %v225 = vsel %vm223, %v205, 0
        %v228 = vsel %vm223, %v206, 0
        %230 = vmatprep.subr.mxu0 0.0
        %231 = vmatpush1.msra.mxu0 %v209
        %232 = vmatprep.subr.mxu0 0.0
        %233 = vmatpush1.msra.mxu0 %v210
        %234 = vmatprep.subr.mxu0 0.0
        %235 = vmatpush1.msra.mxu0 %v211
        %236 = vmatprep.subr.mxu0 0.0
        %237 = vmatpush1.msra.mxu0 %v212
        %238 = vmatprep.subr.mxu0 0.0
        %239 = vmatpush1.msra.mxu0 0.0
        %240 = vmatprep.subr.mxu0 0.0
        %241 = vmatpush1.msra.mxu0 0.0
        %242 = vmatprep.subr.mxu0 0.0
        %243 = vmatpush1.msra.mxu0 0.0
        %244 = vmatprep.subr.mxu0 0.0
        %245 = vmatpush1.msra.mxu0 0.0
        %246 = vmatprep.subr.mxu0 0.0
        %247 = vmatpush1.msra.mxu0 0.0
        %248 = vmatprep.subr.mxu0 0.0
        %249 = vmatpush1.msra.mxu0 0.0
        %250 = vmatprep.subr.mxu0 0.0
        %251 = vmatpush1.msra.mxu0 0.0
        %252 = vmatprep.subr.mxu0 0.0
        %253 = vmatpush1.msra.mxu0 0.0
        %254 = vmatprep.subr.mxu0 0.0
        %255 = vmatpush1.msra.mxu0 0.0
        %256 = vmatprep.subr.mxu0 0.0
        %257 = vmatpush1.msra.mxu0 0.0
        %258 = vmatprep.subr.mxu0 0.0
        %259 = vmatpush1.msra.mxu0 0.0
        %260 = vmatprep.subr.mxu0 0.0
        %261 = vmatpush1.msra.mxu0 0.0
        %262 = vmatprep.subr.mxu0 0.0
        %263 = vmatpush1.msra.mxu0 0.0
        %264 = vmatprep.subr.mxu0 0.0
        %265 = vmatpush1.msra.mxu0 0.0
        %266 = vmatprep.subr.mxu0 0.0
        %267 = vmatpush1.msra.mxu0 0.0
        %268 = vmatprep.subr.mxu0 0.0
        %269 = vmatpush1.msra.mxu0 0.0
        %270 = vmatprep.subr.mxu0 0.0
        %271 = vmatpush1.msra.mxu0 0.0
        %272 = vmatprep.subr.mxu0 0.0
        %273 = vmatpush1.msra.mxu0 0.0
        %274 = vmatprep.subr.mxu0 0.0
        %275 = vmatpush1.msra.mxu0 0.0
        %276 = vmatprep.subr.mxu0 0.0
        %277 = vmatpush1.msra.mxu0 0.0
        %278 = vmatprep.subr.mxu0 0.0
        %279 = vmatpush1.msra.mxu0 0.0
        %280 = vmatprep.subr.mxu0 0.0
        %281 = vmatpush1.msra.mxu0 0.0
        %282 = vmatprep.subr.mxu0 0.0
        %283 = vmatpush1.msra.mxu0 0.0
        %284 = vmatprep.subr.mxu0 0.0
        %285 = vmatpush1.msra.mxu0 0.0
        %286 = vmatprep.subr.mxu0 0.0
        %287 = vmatpush1.msra.mxu0 0.0
        %288 = vmatprep.subr.mxu0 0.0
        %289 = vmatpush1.msra.mxu0 0.0
        %290 = vmatprep.subr.mxu0 0.0
        %291 = vmatpush1.msra.mxu0 0.0
        %292 = vmatprep.subr.mxu0 0.0
        %293 = vmatpush1.msra.mxu0 0.0
        %294 = vmatprep.mubr.f32.mxu0 0.0
        %295 = vmatmul.mubr.f32.gmra.mrb[0].mxu0 %v225
        %v296 = vpop.f32.mrb[0].mxu0
        %v297 = vadd.f32 %v216, %v296
        %v298 = vpop.f32.mrb[0].mxu0
        %299 = vmatprep.mubr.f32.mxu0 0.0
        %300 = vmatmul.mubr.f32.gmra.mrb[0].mxu0 %v228
        %v301 = vpop.f32.mrb[0].mxu0
        %v302 = vadd.f32 %v221, %v301
        %v303 = vpop.f32.mrb[0].mxu0
        %304 = vdwg.mxu0
        %305 = vst [vmem:[%s202] sm:$0xff] %v297
        %306 = vst [vmem:[%s202 + $0x8] sm:$0xf] %v302
        %s307 = scalar_lea.vmem %s181, 32 [#allocation2]
        %v308 = vld [vmem:[%s307] sm:$0xff]
        %v309 = vld [vmem:[%s307 + $0x8] sm:$0xff]
        %v310 = vld [vmem:[%s307 + $0x10] sm:$0xff]
        %v311 = vld [vmem:[%s307 + $0x18] sm:$0xff]
        %312 = vmatprep.subr.mxu0 0.0
        %313 = vmatpush1.msra.mxu0 %v308
        %314 = vmatprep.subr.mxu0 0.0
        %315 = vmatpush1.msra.mxu0 %v309
        %316 = vmatprep.subr.mxu0 0.0
        %317 = vmatpush1.msra.mxu0 %v310
        %318 = vmatprep.subr.mxu0 0.0
        %319 = vmatpush1.msra.mxu0 %v311
        %320 = vmatprep.subr.mxu0 0.0
        %321 = vmatpush1.msra.mxu0 0.0
        %322 = vmatprep.subr.mxu0 0.0
        %323 = vmatpush1.msra.mxu0 0.0
        %324 = vmatprep.subr.mxu0 0.0
        %325 = vmatpush1.msra.mxu0 0.0
        %326 = vmatprep.subr.mxu0 0.0
        %327 = vmatpush1.msra.mxu0 0.0
        %328 = vmatprep.subr.mxu0 0.0
        %329 = vmatpush1.msra.mxu0 0.0
        %330 = vmatprep.subr.mxu0 0.0
        %331 = vmatpush1.msra.mxu0 0.0
        %332 = vmatprep.subr.mxu0 0.0
        %333 = vmatpush1.msra.mxu0 0.0
        %334 = vmatprep.subr.mxu0 0.0
        %335 = vmatpush1.msra.mxu0 0.0
        %336 = vmatprep.subr.mxu0 0.0
        %337 = vmatpush1.msra.mxu0 0.0
        %338 = vmatprep.subr.mxu0 0.0
        %339 = vmatpush1.msra.mxu0 0.0
        %340 = vmatprep.subr.mxu0 0.0
        %341 = vmatpush1.msra.mxu0 0.0
        %342 = vmatprep.subr.mxu0 0.0
        %343 = vmatpush1.msra.mxu0 0.0
        %344 = vmatprep.subr.mxu0 0.0
        %345 = vmatpush1.msra.mxu0 0.0
        %346 = vmatprep.subr.mxu0 0.0
        %347 = vmatpush1.msra.mxu0 0.0
        %348 = vmatprep.subr.mxu0 0.0
        %349 = vmatpush1.msra.mxu0 0.0
        %350 = vmatprep.subr.mxu0 0.0
        %351 = vmatpush1.msra.mxu0 0.0
        %352 = vmatprep.subr.mxu0 0.0
        %353 = vmatpush1.msra.mxu0 0.0
        %354 = vmatprep.subr.mxu0 0.0
        %355 = vmatpush1.msra.mxu0 0.0
        %356 = vmatprep.subr.mxu0 0.0
        %357 = vmatpush1.msra.mxu0 0.0
        %358 = vmatprep.subr.mxu0 0.0
        %359 = vmatpush1.msra.mxu0 0.0
        %360 = vmatprep.subr.mxu0 0.0
        %361 = vmatpush1.msra.mxu0 0.0
        %362 = vmatprep.subr.mxu0 0.0
        %363 = vmatpush1.msra.mxu0 0.0
        %364 = vmatprep.subr.mxu0 0.0
        %365 = vmatpush1.msra.mxu0 0.0
        %366 = vmatprep.subr.mxu0 0.0
        %367 = vmatpush1.msra.mxu0 0.0
        %368 = vmatprep.subr.mxu0 0.0
        %369 = vmatpush1.msra.mxu0 0.0
        %370 = vmatprep.subr.mxu0 0.0
        %371 = vmatpush1.msra.mxu0 0.0
        %372 = vmatprep.subr.mxu0 0.0
        %373 = vmatpush1.msra.mxu0 0.0
        %374 = vmatprep.subr.mxu0 0.0
        %375 = vmatpush1.msra.mxu0 0.0
        %376 = vmatprep.mubr.f32.mxu0 0.0
        %377 = vmatmul.mubr.f32.gmra.mrb[0].mxu0 %v225
        %v378 = vpop.f32.mrb[0].mxu0
        %v379 = vadd.f32 %v216, %v378
        %v380 = vpop.f32.mrb[0].mxu0
        %381 = vmatprep.mubr.f32.mxu0 0.0
        %382 = vmatmul.mubr.f32.gmra.mrb[0].mxu0 %v228
        %v383 = vpop.f32.mrb[0].mxu0
        %v384 = vadd.f32 %v221, %v383
        %v385 = vpop.f32.mrb[0].mxu0
        %386 = vdwg.mxu0
        %s387 = scalar_lea.vmem %s202, 16 [#allocation4]
        %388 = vst [vmem:[%s387] sm:$0xff] %v379
        %389 = vst [vmem:[%s387 + $0x8] sm:$0xf] %v384
        %s390 = sand.u32 %s109, 1
        %s391 = sand.u32 %s109, 1
        %s392 = smul.addr %s391, 32
        %s393 = scalar_lea.vmem [#allocation4], %s392
        // Predicated region
        $region37: #{tpu_custom_call.1} parent=31 // pred_check
          %p394 = pneg %p119
        $region38: #{tpu_custom_call.1} parent=31 // pred_check_branch
          %396 = sbr.rel (%p394) target = $region40
        $region39: #{tpu_custom_call.1} parent=31 // pred_region
          %s397 = smul.u32 2, %s21
          %s398 = smul.addr %s397, 4
          %s399 = sadd.s32 %s22, %s398
          %s400 = smul.addr %s399, 8
          %s401 = scalar_lea.vmem %s3, %s400
          // Predicated region
          $region41: #{tpu_custom_call.1} parent=39 // pred_check
            _
          $region42: #{tpu_custom_call.1} parent=39 // pred_check_branch
            %403 = sbr.rel (0) target = $region44
          $region43: #{tpu_custom_call.1} parent=39 // pred_region
            // Predicated region
            $region45: #{tpu_custom_call.1} parent=43 // pred_check
              _
            $region46: #{tpu_custom_call.1} parent=43 // pred_check_branch
              %405 = sbr.rel (0) target = $region48
            $region47: #{tpu_custom_call.1} parent=43 // pred_region
              // Predicated region
              $region60: #{tpu_custom_call.1} parent=47 // pred_check
                _
              $region61: #{tpu_custom_call.1} parent=47 // pred_check_branch
                %426 = sbr.rel (0) target = $region63
              $region62: #{tpu_custom_call.1} parent=47 // pred_region
                loop: start=0, step=1, limit=1
                $region64: #{tpu_custom_call.1} parent=62 // loop_pre_header
                  _
                $region65: #{tpu_custom_call.1} parent=62 // loop_header
                  %s428 = sphi 0, %s432
                  %p429 = scmp.ge.s32.totalorder %s428, 1
                  %s433 = sphi %s393, %s393
                  %s434 = sphi %s401, %s401
                $region66: #{tpu_custom_call.1} parent=62 // loop_header_branch
                  %431 = sbr.rel (%p429) target = $region70
                $region67: #{tpu_custom_call.1} parent=62 // loop_body
                  %v435 = vld [vmem:[%s433] sm:$0xff]
                  %436 = vst [vmem:[%s434] sm:$0xff] %v435
                  %v437 = vld [vmem:[%s433 + $0x8] sm:$0xff]
                  %438 = vst [vmem:[%s434 + $0x10] sm:$0xff] %v437
                  %v439 = vld [vmem:[%s433 + $0x10] sm:$0xff]
                  %440 = vst [vmem:[%s434 + $0x20] sm:$0xff] %v439
                  %v441 = vld [vmem:[%s433 + $0x18] sm:$0xff]
                  %442 = vst [vmem:[%s434 + $0x30] sm:$0xff] %v441
                $region68: #{tpu_custom_call.1} parent=62 // loop_footer
                  %s432 = sadd.s32 1, %s428
                $region69: #{tpu_custom_call.1} parent=62 // loop_footer_branch
                  %427 = sbr.rel target = $region65
                $region70: #{tpu_custom_call.1} parent=62 // loop_exit
                  _
              $region63: #{tpu_custom_call.1} parent=47 // pred_fallthru
                _
              // Predicated region
              $region71: #{tpu_custom_call.1} parent=47 // pred_check
                _
              $region72: #{tpu_custom_call.1} parent=47 // pred_check_branch
                %444 = sbr.rel target = $region74
              $region73: #{tpu_custom_call.1} parent=47 // pred_region
                _
              $region74: #{tpu_custom_call.1} parent=47 // pred_fallthru
                _
            $region48: #{tpu_custom_call.1} parent=43 // pred_fallthru
              _
            // Predicated region
            $region49: #{tpu_custom_call.1} parent=43 // pred_check
              _
            $region50: #{tpu_custom_call.1} parent=43 // pred_check_branch
              %407 = sbr.rel target = $region52
            $region51: #{tpu_custom_call.1} parent=43 // pred_region
              loop: start=0, step=1, limit=1
              $region53: #{tpu_custom_call.1} parent=51 // loop_pre_header
                _
              $region54: #{tpu_custom_call.1} parent=51 // loop_header
                %s410 = sphi 0, %s414
                %p411 = scmp.ge.s32.totalorder %s410, 1
                %s415 = sphi %s393, %s393
                %s416 = sphi %s401, %s401
              $region55: #{tpu_custom_call.1} parent=51 // loop_header_branch
                %413 = sbr.rel (%p411) target = $region59
              $region56: #{tpu_custom_call.1} parent=51 // loop_body
                %v417 = vld [vmem:[%s415] sm:$0xff]
                %418 = vst [vmem:[%s416] sm:$0xff] %v417
                %v419 = vld [vmem:[%s415 + $0x8] sm:$0xff]
                %420 = vst [vmem:[%s416 + $0x10] sm:$0xff] %v419
                %v421 = vld [vmem:[%s415 + $0x10] sm:$0xff]
                %422 = vst [vmem:[%s416 + $0x20] sm:$0xff] %v421
                %v423 = vld [vmem:[%s415 + $0x18] sm:$0xff]
                %424 = vst [vmem:[%s416 + $0x30] sm:$0xff] %v423
              $region57: #{tpu_custom_call.1} parent=51 // loop_footer
                %s414 = sadd.s32 1, %s410
              $region58: #{tpu_custom_call.1} parent=51 // loop_footer_branch
                %409 = sbr.rel target = $region54
              $region59: #{tpu_custom_call.1} parent=51 // loop_exit
                _
            $region52: #{tpu_custom_call.1} parent=43 // pred_fallthru
              _
          $region44: #{tpu_custom_call.1} parent=39 // pred_fallthru
            _
          %445 = vnop
        $region40: #{tpu_custom_call.1} parent=31 // pred_fallthru
          _
      $region32: #{tpu_custom_call.1} parent=5 // pred_fallthru
        _
      %p446 = scmp.le.s32.totalorder 2, %s12
      // Predicated region
      $region75: #{tpu_custom_call.1} parent=5 // pred_check
        %p447 = pneg %p446
      $region76: #{tpu_custom_call.1} parent=5 // pred_check_branch
        %449 = sbr.rel (%p447) target = $region78
      $region77: #{tpu_custom_call.1} parent=5 // pred_region
        %s450 = ssub.s32 %s12, 2
        // Predicated region
        $region79: #{tpu_custom_call.1} parent=77 // pred_check
          %p451 = pneg %p125
        $region80: #{tpu_custom_call.1} parent=77 // pred_check_branch
          %453 = sbr.rel (%p451) target = $region82
        $region81: #{tpu_custom_call.1} parent=77 // pred_region
          %s454 = sand.u32 %s110, 1
          %s455 = sand.u32 %s110, 1
          %s456 = smul.addr %s455, 32
          %s457 = scalar_lea.vmem [#allocation4], %s456
        $region82: #{tpu_custom_call.1} parent=77 // pred_fallthru
          _
      $region78: #{tpu_custom_call.1} parent=5 // pred_fallthru
        _
    $region6: #{tpu_custom_call.1} parent=1 // loop_footer
      %s16 = sadd.s32 1, %s12
    $region7: #{tpu_custom_call.1} parent=1 // loop_footer_branch
      %11 = sbr.rel target = $region3
    $region8: #{tpu_custom_call.1} parent=1 // loop_exit
      _
    %458 = vsyncpa [#allocation3], 1
    %s459 = scalar_lea.sflag [#allocation3], 1
    %460 = vsyncpa %s459, 1

</llo_original>
